<compile_context>
chip_gen: v7x
topology: tpu7x:2x2x1
jax: 0.10.0
libtpu: 0.0.40
codegen_flags: <defaults>
</compile_context>

<pallas_src>
import jax
import jax.numpy as jnp
from jax.experimental import pallas as pl
from jax.experimental.pallas import tpu as pltpu


def _fused_copy_kernel(*refs):
    """Variadic identity kernel: refs = (in_0..in_{n-1}, out_0..out_{n-1})."""
    n = len(refs) // 2
    for i in range(n):
        refs[n + i][...] = refs[i][...]


def fused_identity_copy(*xs):
    """Copy every input through VMEM with a single pallas_call.

    Each array is mapped as one full-extent VMEM block (no grid), so there is
    no padding, no slab reshaping, and no per-step pipeline overhead.
    input_output_aliases is intentionally not used here because the demo
    compares outputs against the (non-donated) inputs; enable it when the
    inputs can be donated to halve HBM traffic.
    """
    if not xs:
        return ()
    out_shape = tuple(jax.ShapeDtypeStruct(x.shape, x.dtype) for x in xs)
    vmem_spec = pl.BlockSpec(memory_space=pltpu.MemorySpace.VMEM)
    return pl.pallas_call(
        _fused_copy_kernel,
        out_shape=out_shape,
        in_specs=[vmem_spec for _ in xs],
        out_specs=tuple(vmem_spec for _ in xs),
    )(*xs)


class Case:
    """JAX port of the (no-op) PyTorch Case module.

    forward(*x) is `pass` in the reference -> returns None and does no work.
    No kernel is launched here (launching one would be pure overhead).
    """

    def __init__(self, *cases):
        # Stored but never used in forward, matching the reference module.
        self.cases = cases

    def __call__(self, *x):
        return None


if __name__ == "__main__":
    key = jax.random.PRNGKey(0)
    k1, k2 = jax.random.split(key)
    # Small NCHW-style inputs consistent with a generic conditional block.
    x = jax.random.normal(k1, (2, 4, 16, 16), dtype=jnp.float32)
    y = jax.random.normal(k2, (2, 4, 16, 16), dtype=jnp.float32)

    # Module forward: faithful no-op.
    mod = Case(("dummy_condition", None))
    result = mod(x, y)
    assert result is None

    # Exercise the fused identity Pallas kernel once on the same inputs.
    outs = fused_identity_copy(x, y)
    outs = jax.block_until_ready(outs)
    assert all(
        bool(jnp.array_equal(o, i)) for o, i in zip(outs, (x, y))
    ), "identity kernel mismatch"

    print("KERNEL_OK")
</pallas_src>

<mosaic_0001>
module attributes {stable_mosaic.version = 11 : i64} {
  func.func @_fused_copy_kernel(%arg0: memref<2x4x16x16xf32, #tpu.memory_space<vmem>>, %arg1: memref<2x4x16x16xf32, #tpu.memory_space<vmem>>, %arg2: memref<2x4x16x16xf32, #tpu.memory_space<vmem>>, %arg3: memref<2x4x16x16xf32, #tpu.memory_space<vmem>>) attributes {dimension_semantics = [], scalar_prefetch = 0 : i64, scratch_operands = 0 : i64, tpu.core_type = #tpu.core_type<tc>} {
    %c0 = arith.constant 0 : index
    %c0_0 = arith.constant 0 : index
    %c0_1 = arith.constant 0 : index
    %c0_2 = arith.constant 0 : index
    %0 = vector.load %arg0[%c0, %c0_0, %c0_1, %c0_2] : memref<2x4x16x16xf32, #tpu.memory_space<vmem>>, vector<2x4x16x16xf32>
    %c0_3 = arith.constant 0 : index
    %c0_4 = arith.constant 0 : index
    %c0_5 = arith.constant 0 : index
    %c0_6 = arith.constant 0 : index
    %1 = vector.load %arg2[%c0_3, %c0_4, %c0_5, %c0_6] : memref<2x4x16x16xf32, #tpu.memory_space<vmem>>, vector<2x4x16x16xf32>
    tpu.vector_store %arg2[%c0_3, %c0_4, %c0_5, %c0_6], %0 {strides = array<i32>} : memref<2x4x16x16xf32, #tpu.memory_space<vmem>>, vector<2x4x16x16xf32>,
    %c0_7 = arith.constant 0 : index
    %c0_8 = arith.constant 0 : index
    %c0_9 = arith.constant 0 : index
    %c0_10 = arith.constant 0 : index
    %2 = vector.load %arg1[%c0_7, %c0_8, %c0_9, %c0_10] : memref<2x4x16x16xf32, #tpu.memory_space<vmem>>, vector<2x4x16x16xf32>
    %c0_11 = arith.constant 0 : index
    %c0_12 = arith.constant 0 : index
    %c0_13 = arith.constant 0 : index
    %c0_14 = arith.constant 0 : index
    %3 = vector.load %arg3[%c0_11, %c0_12, %c0_13, %c0_14] : memref<2x4x16x16xf32, #tpu.memory_space<vmem>>, vector<2x4x16x16xf32>
    tpu.vector_store %arg3[%c0_11, %c0_12, %c0_13, %c0_14], %2 {strides = array<i32>} : memref<2x4x16x16xf32, #tpu.memory_space<vmem>>, vector<2x4x16x16xf32>,
    return
  }
}

</mosaic_0001>

<llo_original>
// kernel: tpu_custom_call.1
$region0: #{tpu_custom_call.1}
  #allocation0 [shape = 'u32[]', space=smem, size = 0x4, offset = 0x4, fixed_abs, tag = 'smem constant byte address 0x4 - core index']
  #allocation1 [shape = 'u32[144,128]{1,0:T(1,128)}', space=vmem, size = 0x12000, scoped, tag = 'internal scratch']
  %s0 = inlined_call_operand.hbm [shape: f32[2,4,16,16], index: 0, kind: input, shape index: {}]
  %s1 = inlined_call_operand.hbm [shape: f32[2,4,16,16], index: 1, kind: input, shape index: {}]
  %s2 = inlined_call_operand.hbm [shape: f32[2,4,16,16], index: 2, kind: output, shape index: {0}]
  %s3 = inlined_call_operand.hbm [shape: f32[2,4,16,16], index: 3, kind: output, shape index: {1}]
  %4 = xla_tuple %s2, %s3
  %s5 = sld [smem:[#allocation0]]
  $region34: #{tpu_custom_call.1} parent=0
    _
  %s7 = ssub.s32 1, %s5
  %s8 = scalar_select 0, %s7, %s5
  $region1: #{tpu_custom_call.1} parent=0
    #allocation2 [shape = 'u8[65536]{0}', space=vmem, size = 0x10000, scoped, tag = 'input window, operand 0, single buffered']
    #allocation3 [shape = 's32[1]{0}', space=sflag, size = 0x4, scoped, tag = 'scoped memory for tpu_custom_call.1']
    #allocation4 [shape = 's32[1]{0}', space=sflag, size = 0x4, scoped, tag = 'scoped memory for tpu_custom_call.1']
    #allocation5 [shape = 'u8[65536]{0}', space=vmem, size = 0x10000, scoped, tag = 'input window, operand 1, single buffered']
    #allocation6 [shape = 's32[1]{0}', space=sflag, size = 0x4, scoped, tag = 'scoped memory for tpu_custom_call.1']
    #allocation7 [shape = 'u8[65536]{0}', space=vmem, size = 0x10000, scoped, tag = 'output window, operand 0, single buffered']
    #allocation8 [shape = 'u8[65536]{0}', space=vmem, size = 0x10000, scoped, tag = 'output window, operand 1, single buffered']
    #allocation9 [shape = 's32[1]{0}', space=sflag, size = 0x4, scoped, tag = 'scoped memory for tpu_custom_call.1']
    %9 = vsyncpa [#allocation3], 0
    %10 = vsyncpa [#allocation6], 0
    %11 = vsyncpa [#allocation4], 0
    %12 = vsyncpa [#allocation9], 0
    // Predicated region
    $region2: #{tpu_custom_call.1} parent=1 // pred_check
      _
    $region3: #{tpu_custom_call.1} parent=1 // pred_check_branch
      %14 = sbr.rel (0) target = $region5
    $region4: #{tpu_custom_call.1} parent=1 // pred_region
      %s16 = ssub.s32 2048, 2048
      %17 = vsyncadd [#allocation3], %s16
      %s18 = sshll.u32 [#allocation2], 4
      %s19 = int_to_ptr.vmem [resolvable:$true] %s18
      %24 = dma.hbm_to_vmem [thread:$0]  %s0, 2048, %s19, [#allocation3], 128, 128, 8
    $region5: #{tpu_custom_call.1} parent=1 // pred_fallthru
      _
    // Predicated region
    $region6: #{tpu_custom_call.1} parent=1 // pred_check
      _
    $region7: #{tpu_custom_call.1} parent=1 // pred_check_branch
      %26 = sbr.rel (0) target = $region9
    $region8: #{tpu_custom_call.1} parent=1 // pred_region
      %s28 = ssub.s32 2048, 2048
      %29 = vsyncadd [#allocation6], %s28
      %s30 = sshll.u32 [#allocation5], 4
      %s31 = int_to_ptr.vmem [resolvable:$true] %s30
      %36 = dma.hbm_to_vmem [thread:$0]  %s1, 2048, %s31, [#allocation6], 128, 128, 8
    $region9: #{tpu_custom_call.1} parent=1 // pred_fallthru
      _
    // Predicated region
    $region10: #{tpu_custom_call.1} parent=1 // pred_check
      _
    $region11: #{tpu_custom_call.1} parent=1 // pred_check_branch
      %38 = sbr.rel (0) target = $region13
    $region12: #{tpu_custom_call.1} parent=1 // pred_region
      %39 = dma.done [#allocation3], 2048
    $region13: #{tpu_custom_call.1} parent=1 // pred_fallthru
      _
    // Predicated region
    $region14: #{tpu_custom_call.1} parent=1 // pred_check
      _
    $region15: #{tpu_custom_call.1} parent=1 // pred_check_branch
      %41 = sbr.rel (0) target = $region17
    $region16: #{tpu_custom_call.1} parent=1 // pred_region
      %42 = dma.done [#allocation6], 2048
    $region17: #{tpu_custom_call.1} parent=1 // pred_fallthru
      _
    %v43 = vld [vmem:[#allocation2] sm:$0xff]
    %v44 = vld [vmem:[#allocation2 + $0x8] sm:$0xff]
    %v45 = vld [vmem:[#allocation2 + $0x10] sm:$0xff]
    %v46 = vld [vmem:[#allocation2 + $0x18] sm:$0xff]
    %v47 = vld [vmem:[#allocation2 + $0x20] sm:$0xff]
    %v48 = vld [vmem:[#allocation2 + $0x28] sm:$0xff]
    %v49 = vld [vmem:[#allocation2 + $0x30] sm:$0xff]
    %v50 = vld [vmem:[#allocation2 + $0x38] sm:$0xff]
    %v51 = vld [vmem:[#allocation2 + $0x40] sm:$0xff]
    %v52 = vld [vmem:[#allocation2 + $0x48] sm:$0xff]
    %v53 = vld [vmem:[#allocation2 + $0x50] sm:$0xff]
    %v54 = vld [vmem:[#allocation2 + $0x58] sm:$0xff]
    %v55 = vld [vmem:[#allocation2 + $0x60] sm:$0xff]
    %v56 = vld [vmem:[#allocation2 + $0x68] sm:$0xff]
    %v57 = vld [vmem:[#allocation2 + $0x70] sm:$0xff]
    %v58 = vld [vmem:[#allocation2 + $0x78] sm:$0xff]
    %vm59 = vcmask 130048
    %60 = vst.msk [vmem:[#allocation7] sm:$0xff] %vm59, %v43
    %61 = vst.msk [vmem:[#allocation7 + $0x8] sm:$0xff] %vm59, %v44
    %62 = vst.msk [vmem:[#allocation7 + $0x10] sm:$0xff] %vm59, %v45
    %63 = vst.msk [vmem:[#allocation7 + $0x18] sm:$0xff] %vm59, %v46
    %64 = vst.msk [vmem:[#allocation7 + $0x20] sm:$0xff] %vm59, %v47
    %65 = vst.msk [vmem:[#allocation7 + $0x28] sm:$0xff] %vm59, %v48
    %66 = vst.msk [vmem:[#allocation7 + $0x30] sm:$0xff] %vm59, %v49
    %67 = vst.msk [vmem:[#allocation7 + $0x38] sm:$0xff] %vm59, %v50
    %68 = vst.msk [vmem:[#allocation7 + $0x40] sm:$0xff] %vm59, %v51
    %69 = vst.msk [vmem:[#allocation7 + $0x48] sm:$0xff] %vm59, %v52
    %70 = vst.msk [vmem:[#allocation7 + $0x50] sm:$0xff] %vm59, %v53
    %71 = vst.msk [vmem:[#allocation7 + $0x58] sm:$0xff] %vm59, %v54
    %72 = vst.msk [vmem:[#allocation7 + $0x60] sm:$0xff] %vm59, %v55
    %73 = vst.msk [vmem:[#allocation7 + $0x68] sm:$0xff] %vm59, %v56
    %74 = vst.msk [vmem:[#allocation7 + $0x70] sm:$0xff] %vm59, %v57
    %75 = vst.msk [vmem:[#allocation7 + $0x78] sm:$0xff] %vm59, %v58
    %v76 = vld [vmem:[#allocation5] sm:$0xff]
    %v77 = vld [vmem:[#allocation5 + $0x8] sm:$0xff]
    %v78 = vld [vmem:[#allocation5 + $0x10] sm:$0xff]
    %v79 = vld [vmem:[#allocation5 + $0x18] sm:$0xff]
    %v80 = vld [vmem:[#allocation5 + $0x20] sm:$0xff]
    %v81 = vld [vmem:[#allocation5 + $0x28] sm:$0xff]
    %v82 = vld [vmem:[#allocation5 + $0x30] sm:$0xff]
    %v83 = vld [vmem:[#allocation5 + $0x38] sm:$0xff]
    %v84 = vld [vmem:[#allocation5 + $0x40] sm:$0xff]
    %v85 = vld [vmem:[#allocation5 + $0x48] sm:$0xff]
    %v86 = vld [vmem:[#allocation5 + $0x50] sm:$0xff]
    %v87 = vld [vmem:[#allocation5 + $0x58] sm:$0xff]
    %v88 = vld [vmem:[#allocation5 + $0x60] sm:$0xff]
    %v89 = vld [vmem:[#allocation5 + $0x68] sm:$0xff]
    %v90 = vld [vmem:[#allocation5 + $0x70] sm:$0xff]
    %v91 = vld [vmem:[#allocation5 + $0x78] sm:$0xff]
    %92 = vst.msk [vmem:[#allocation8] sm:$0xff] %vm59, %v76
    %93 = vst.msk [vmem:[#allocation8 + $0x8] sm:$0xff] %vm59, %v77
    %94 = vst.msk [vmem:[#allocation8 + $0x10] sm:$0xff] %vm59, %v78
    %95 = vst.msk [vmem:[#allocation8 + $0x18] sm:$0xff] %vm59, %v79
    %96 = vst.msk [vmem:[#allocation8 + $0x20] sm:$0xff] %vm59, %v80
    %97 = vst.msk [vmem:[#allocation8 + $0x28] sm:$0xff] %vm59, %v81
    %98 = vst.msk [vmem:[#allocation8 + $0x30] sm:$0xff] %vm59, %v82
    %99 = vst.msk [vmem:[#allocation8 + $0x38] sm:$0xff] %vm59, %v83
    %100 = vst.msk [vmem:[#allocation8 + $0x40] sm:$0xff] %vm59, %v84
    %101 = vst.msk [vmem:[#allocation8 + $0x48] sm:$0xff] %vm59, %v85
    %102 = vst.msk [vmem:[#allocation8 + $0x50] sm:$0xff] %vm59, %v86
    %103 = vst.msk [vmem:[#allocation8 + $0x58] sm:$0xff] %vm59, %v87
    %104 = vst.msk [vmem:[#allocation8 + $0x60] sm:$0xff] %vm59, %v88
    %105 = vst.msk [vmem:[#allocation8 + $0x68] sm:$0xff] %vm59, %v89
    %106 = vst.msk [vmem:[#allocation8 + $0x70] sm:$0xff] %vm59, %v90
    %107 = vst.msk [vmem:[#allocation8 + $0x78] sm:$0xff] %vm59, %v91
    // Predicated region
    $region18: #{tpu_custom_call.1} parent=1 // pred_check
      _
    $region19: #{tpu_custom_call.1} parent=1 // pred_check_branch
      %109 = sbr.rel (0) target = $region21
    $region20: #{tpu_custom_call.1} parent=1 // pred_region
      %s111 = ssub.s32 2048, 2048
      %112 = vsyncadd [#allocation4], %s111
      %s113 = sshll.u32 [#allocation7], 4
      %s114 = int_to_ptr.vmem [resolvable:$true] %s113
      %119 = dma.vmem_to_hbm [thread:$0]  %s114, 2048, %s2, [#allocation4], 128, 128, 8
    $region21: #{tpu_custom_call.1} parent=1 // pred_fallthru
      _
    // Predicated region
    $region22: #{tpu_custom_call.1} parent=1 // pred_check
      _
    $region23: #{tpu_custom_call.1} parent=1 // pred_check_branch
      %121 = sbr.rel (0) target = $region25
    $region24: #{tpu_custom_call.1} parent=1 // pred_region
      %s123 = ssub.s32 2048, 2048
      %124 = vsyncadd [#allocation9], %s123
      %s125 = sshll.u32 [#allocation8], 4
      %s126 = int_to_ptr.vmem [resolvable:$true] %s125
      %131 = dma.vmem_to_hbm [thread:$0]  %s126, 2048, %s3, [#allocation9], 128, 128, 8
    $region25: #{tpu_custom_call.1} parent=1 // pred_fallthru
      _
    // Predicated region
    $region26: #{tpu_custom_call.1} parent=1 // pred_check
      _
    $region27: #{tpu_custom_call.1} parent=1 // pred_check_branch
      %133 = sbr.rel (0) target = $region29
    $region28: #{tpu_custom_call.1} parent=1 // pred_region
      %134 = dma.done [#allocation4], 2048
    $region29: #{tpu_custom_call.1} parent=1 // pred_fallthru
      _
    // Predicated region
    $region30: #{tpu_custom_call.1} parent=1 // pred_check
      _
    $region31: #{tpu_custom_call.1} parent=1 // pred_check_branch
      %136 = sbr.rel (0) target = $region33
    $region32: #{tpu_custom_call.1} parent=1 // pred_region
      %137 = dma.done [#allocation9], 2048
    $region33: #{tpu_custom_call.1} parent=1 // pred_fallthru
      _
    %138 = vsyncpa [#allocation3], 1
    %139 = vsyncpa [#allocation6], 1
    %140 = vsyncpa [#allocation4], 1
    %141 = vsyncpa [#allocation9], 1

</llo_original>
